<compile_context>
chip_gen: v7x
topology: tpu7x:2x2x1
jax: 0.10.0
libtpu: 0.0.40
codegen_flags: <defaults>
</compile_context>

<pallas_src>
import functools

import jax
import jax.numpy as jnp
from jax import lax
from jax.experimental import pallas as pl
from jax.experimental.pallas import tpu as pltpu


def factorization(dimension: int, factor: int = -1):
    """Same factorization as toolkit/models/lokr.py."""
    if factor > 0 and dimension % factor == 0:
        return factor, dimension // factor
    if factor == -1:
        factor = dimension
    m, n = 1, dimension
    length = m + n
    while m < n:
        new_m = m + 1
        while dimension % new_m != 0:
            new_m += 1
        new_n = dimension // new_m
        if new_m + new_n > length or new_m > factor:
            break
        m, n = new_m, new_n
    if m > n:
        n, m = m, n
    return m, n


def _pick_tile(dim: int, cap: int, align: int) -> int:
    """Largest `align`-multiple tile <= cap that divides dim (else full dim)."""
    if dim <= cap:
        return dim
    t = (cap // align) * align
    while t >= align:
        if dim % t == 0:
            return t
        t -= align
    return dim


def _lokr_linear_kernel(x_ref, w_ref, b_ref, b2t_ref, b1_ref, o_ref):
    x = x_ref[...]
    # Main pass: x @ w_org_tile^T  (the HBM-bound sweep over the frozen weight).
    acc = lax.dot_general(x, w_ref[...], (((1,), (1,)), ((), ())),
                          preferred_element_type=jnp.float32)
    # LoKr delta in low-rank form: (x @ B2^T) @ B1_tile^T  (coeff pre-folded
    # into B2 in the wrapper — no full-size VPU multiply, no kron material.).
    u = jnp.dot(x, b2t_ref[...], preferred_element_type=jnp.float32)
    acc = acc + lax.dot_general(u, b1_ref[...], (((1,), (1,)), ((), ())),
                                preferred_element_type=jnp.float32)
    o_ref[...] = (acc + b_ref[...]).astype(o_ref.dtype)


def lokr_linear_forward(x, w_org, bias, lokr_w1, lokr_w2_a, lokr_w2_b,
                        multiplier, scale, *, block_b=128, block_out=256):
    batch, in_dim = x.shape
    out_dim = w_org.shape[0]
    out_l, in_m = lokr_w1.shape
    out_k, rank = lokr_w2_a.shape
    in_n = lokr_w2_b.shape[1]
    assert w_org.shape == (out_dim, in_dim)
    assert out_l * out_k == out_dim and in_m * in_n == in_dim
    assert lokr_w2_b.shape[0] == rank

    f32 = jnp.float32
    coeff = jnp.asarray(multiplier, f32) * jnp.asarray(scale, f32)

    # Tiny parameter-side factors (XLA glue, O(dim * in_m * rank) work):
    #   kron(w1, w2a @ w2b) == kron(w1, w2a) @ kron(I_{in_m}, w2b)
    r_dim = in_m * rank
    b1 = jnp.kron(lokr_w1.astype(f32), lokr_w2_a.astype(f32))        # (out_dim, R)
    b2 = jnp.kron(jnp.eye(in_m, dtype=f32), lokr_w2_b.astype(f32))   # (R, in_dim)
    b2t = (coeff * b2).T                                             # (in_dim, R)

    if bias is None:
        bias2 = jnp.zeros((1, out_dim), f32)
    else:
        bias2 = jnp.asarray(bias, f32).reshape(1, out_dim)

    tb = _pick_tile(batch, block_b, 8)
    tn = _pick_tile(out_dim, block_out, 128)
    grid = (batch // tb, out_dim // tn)

    in_specs = [
        pl.BlockSpec((tb, in_dim),    lambda i, j: (i, 0)),   # x (batch tile, full K)
        pl.BlockSpec((tn, in_dim),    lambda i, j: (j, 0)),   # w_org (out tile, full K)
        pl.BlockSpec((1, tn),         lambda i, j: (0, j)),   # bias tile
        pl.BlockSpec((in_dim, r_dim), lambda i, j: (0, 0)),   # B2^T (constant block)
        pl.BlockSpec((tn, r_dim),     lambda i, j: (j, 0)),   # B1 (out tile)
    ]
    out_spec = pl.BlockSpec((tb, tn), lambda i, j: (i, j))

    return pl.pallas_call(
        _lokr_linear_kernel,
        out_shape=jax.ShapeDtypeStruct((batch, out_dim), x.dtype),
        grid=grid,
        in_specs=in_specs,
        out_specs=out_spec,
        compiler_params=pltpu.CompilerParams(
            dimension_semantics=("parallel", "parallel")),
    )(x, w_org, bias2, b2t, b1)


if __name__ == "__main__":
    # Synthetic LoKr config (Linear branch): in=out=256, lora_dim=4, alpha=1,
    # factor=-1, decompose_both=False, multiplier=1.0
    batch, in_dim, out_dim = 16, 256, 256
    lora_dim, alpha, multiplier, factor = 4, 1.0, 1.0, -1

    in_m, in_n = factorization(in_dim, factor)     # (16, 16)
    out_l, out_k = factorization(out_dim, factor)  # (16, 16)
    # decompose_both=False          -> use_w1=True : lokr_w1   (out_l, in_m)
    # lora_dim < max(out_k, in_n)/2 -> rank w2     : lokr_w2_a (out_k, lora_dim)
    #                                                lokr_w2_b (lora_dim, in_n)
    # use_w2=False                  -> scale = alpha / lora_dim
    scale = alpha / lora_dim

    ks = jax.random.split(jax.random.PRNGKey(0), 6)
    x = jax.random.normal(ks[0], (batch, in_dim), jnp.float32)
    w_org = 0.02 * jax.random.normal(ks[1], (out_dim, in_dim), jnp.float32)
    bias = 0.01 * jax.random.normal(ks[2], (out_dim,), jnp.float32)
    lokr_w1 = 0.1 * jax.random.normal(ks[3], (out_l, in_m), jnp.float32)
    # NOTE: torch inits lokr_w2_b to zeros (delta would be exactly 0); we use
    # small deterministic random values so the LoKr path is non-trivial.
    lokr_w2_a = 0.1 * jax.random.normal(ks[4], (out_k, lora_dim), jnp.float32)
    lokr_w2_b = 0.1 * jax.random.normal(ks[5], (lora_dim, in_n), jnp.float32)

    # Small tiles so the (2, 2) grid / pipelining path is exercised at toy size.
    fwd = jax.jit(functools.partial(lokr_linear_forward, block_b=8, block_out=128))
    y = fwd(x, w_org, bias, lokr_w1, lokr_w2_a, lokr_w2_b,
            jnp.float32(multiplier), jnp.float32(scale))
    y = jax.block_until_ready(y)

    # Pure-JAX reference of the module forward.
    w2_ref = lokr_w2_a @ lokr_w2_b
    w_ref = w_org + (multiplier * scale) * jnp.kron(lokr_w1, w2_ref)
    y_ref = x @ w_ref.T + bias[None, :]
    assert jnp.allclose(y, y_ref, atol=1e-4, rtol=1e-4), "mismatch vs reference"

    print("KERNEL_OK")
</pallas_src>

<mosaic_0001>
module attributes {stable_mosaic.version = 11 : i64} {
  func.func @_lokr_linear_kernel(%arg0: i32, %arg1: i32, %arg2: memref<8x256xf32, #tpu.memory_space<vmem>>, %arg3: memref<128x256xf32, #tpu.memory_space<vmem>>, %arg4: memref<1x128xf32, #tpu.memory_space<vmem>>, %arg5: memref<256x64xf32, #tpu.memory_space<vmem>>, %arg6: memref<128x64xf32, #tpu.memory_space<vmem>>, %arg7: memref<8x128xf32, #tpu.memory_space<vmem>>) attributes {dimension_semantics = [#tpu.dimension_semantics<parallel>, #tpu.dimension_semantics<parallel>], iteration_bounds = array<i64: 2, 2>, scalar_prefetch = 0 : i64, scratch_operands = 0 : i64, tpu.core_type = #tpu.core_type<tc>, window_params = [{transform_indices = @transform_0, window_bounds = array<i64: 8, 256>}, {transform_indices = @transform_1, window_bounds = array<i64: 128, 256>}, {transform_indices = @transform_2, window_bounds = array<i64: 1, 128>}, {pipeline_mode = #tpu.pipeline_mode<synchronous>, transform_indices = @transform_3, window_bounds = array<i64: 256, 64>}, {transform_indices = @transform_4, window_bounds = array<i64: 128, 64>}, {transform_indices = @transform_5, window_bounds = array<i64: 8, 128>}]} {
    %c0 = arith.constant 0 : index
    %c0_0 = arith.constant 0 : index
    %0 = vector.load %arg2[%c0, %c0_0] : memref<8x256xf32, #tpu.memory_space<vmem>>, vector<8x256xf32>
    %c0_1 = arith.constant 0 : index
    %c0_2 = arith.constant 0 : index
    %1 = vector.load %arg3[%c0_1, %c0_2] : memref<128x256xf32, #tpu.memory_space<vmem>>, vector<128x256xf32>
    %cst = arith.constant dense<0.000000e+00> : vector<8x128xf32>
    %2 = tpu.matmul %0, %1, %cst {dimension_numbers = #tpu.dot_dimension_numbers<[1], [1], [0], [0], [0, 0, 1, 0], [], []>} : vector<8x256xf32>, vector<128x256xf32>, vector<8x128xf32> -> vector<8x128xf32>
    %c0_3 = arith.constant 0 : index
    %c0_4 = arith.constant 0 : index
    %3 = vector.load %arg5[%c0_3, %c0_4] : memref<256x64xf32, #tpu.memory_space<vmem>>, vector<256x64xf32>
    %cst_5 = arith.constant dense<0.000000e+00> : vector<8x64xf32>
    %4 = tpu.matmul %0, %3, %cst_5 {dimension_numbers = #tpu.dot_dimension_numbers<[1], [0], [0], [1], [0, 0, 1, 1], [], []>} : vector<8x256xf32>, vector<256x64xf32>, vector<8x64xf32> -> vector<8x64xf32>
    %c0_6 = arith.constant 0 : index
    %c0_7 = arith.constant 0 : index
    %5 = vector.load %arg6[%c0_6, %c0_7] : memref<128x64xf32, #tpu.memory_space<vmem>>, vector<128x64xf32>
    %cst_8 = arith.constant dense<0.000000e+00> : vector<8x128xf32>
    %6 = tpu.matmul %4, %5, %cst_8 {dimension_numbers = #tpu.dot_dimension_numbers<[1], [1], [0], [0], [0, 0, 1, 0], [], []>} : vector<8x64xf32>, vector<128x64xf32>, vector<8x128xf32> -> vector<8x128xf32>
    %7 = arith.addf %2, %6 : vector<8x128xf32>
    %c0_9 = arith.constant 0 : index
    %c0_10 = arith.constant 0 : index
    %8 = vector.load %arg4[%c0_9, %c0_10] : memref<1x128xf32, #tpu.memory_space<vmem>>, vector<1x128xf32>
    %9 = vector.broadcast %8 : vector<1x128xf32> to vector<8x128xf32>
    %10 = arith.addf %7, %9 : vector<8x128xf32>
    %c0_11 = arith.constant 0 : index
    %c0_12 = arith.constant 0 : index
    %11 = vector.load %arg7[%c0_11, %c0_12] : memref<8x128xf32, #tpu.memory_space<vmem>>, vector<8x128xf32>
    tpu.vector_store %arg7[%c0_11, %c0_12], %10 {strides = array<i32>} : memref<8x128xf32, #tpu.memory_space<vmem>>, vector<8x128xf32>,
    return
  }
  func.func @transform_0(%arg0: i32, %arg1: i32) -> (i32, i32) {
    %c0_i32 = arith.constant 0 : i32
    %c0_i32_0 = arith.constant 0 : i32
    return %arg0, %c0_i32 : i32, i32
  }
  func.func @transform_1(%arg0: i32, %arg1: i32) -> (i32, i32) {
    %c0_i32 = arith.constant 0 : i32
    %c0_i32_0 = arith.constant 0 : i32
    return %arg1, %c0_i32 : i32, i32
  }
  func.func @transform_2(%arg0: i32, %arg1: i32) -> (i32, i32) {
    %c0_i32 = arith.constant 0 : i32
    %c0_i32_0 = arith.constant 0 : i32
    return %c0_i32, %arg1 : i32, i32
  }
  func.func @transform_3(%arg0: i32, %arg1: i32) -> (i32, i32) {
    %c0_i32 = arith.constant 0 : i32
    %c0_i32_0 = arith.constant 0 : i32
    %c0_i32_1 = arith.constant 0 : i32
    return %c0_i32, %c0_i32_0 : i32, i32
  }
  func.func @transform_4(%arg0: i32, %arg1: i32) -> (i32, i32) {
    %c0_i32 = arith.constant 0 : i32
    %c0_i32_0 = arith.constant 0 : i32
    return %arg1, %c0_i32 : i32, i32
  }
  func.func @transform_5(%arg0: i32, %arg1: i32) -> (i32, i32) {
    %c0_i32 = arith.constant 0 : i32
    return %arg0, %arg1 : i32, i32
  }
}

</mosaic_0001>

<llo_original>
// kernel: lokr_linear_forward.1
$region0: #{lokr_linear_forward.1}
  #allocation0 [shape = 'u32[]', space=smem, size = 0x4, offset = 0x4, fixed_abs, tag = 'smem constant byte address 0x4 - core index']
  #allocation1 [shape = 'u32[144,128]{1,0:T(1,128)}', space=vmem, size = 0x12000, scoped, tag = 'internal scratch']
  %s0 = inlined_call_operand.vmem [shape: f32[16,256], index: 0, kind: input, shape index: {}]
  %s1 = inlined_call_operand.vmem [shape: f32[256,256], index: 1, kind: input, shape index: {}]
  %s2 = inlined_call_operand.vmem [shape: f32[1,256], index: 2, kind: input, shape index: {}]
  %s3 = inlined_call_operand.vmem [shape: f32[256,64], index: 3, kind: input, shape index: {}]
  %s4 = inlined_call_operand.vmem [shape: f32[256,64], index: 4, kind: input, shape index: {}]
  %s5 = inlined_call_operand.hbm [shape: f32[16,256], index: 5, kind: output, shape index: {}]
  %s6 = sld [smem:[#allocation0]]
  $region53: #{lokr_linear_forward.1} parent=0
    _
  %s8 = ssub.s32 1, %s6
  %s9 = scalar_select 0, %s8, %s6
  $region1: #{lokr_linear_forward.1} parent=0
    #allocation2 [shape = 'u8[8192]{0}', space=vmem, size = 0x2000, scoped, tag = 'output window, operand 0']
    #allocation3 [shape = 's32[2]{0}', space=sflag, size = 0x8, scoped, tag = 'scoped memory for lokr_linear_forward.1']
    %10 = vsyncpa [#allocation3], 0
    %s11 = scalar_lea.sflag [#allocation3], 1
    %12 = vsyncpa %s11, 0
    loop: start=0, step=1, limit=6
    $region2: #{lokr_linear_forward.1} parent=1 // loop_pre_header
      _
    $region3: #{lokr_linear_forward.1} parent=1 // loop_header
      %s14 = sphi 0, %s18
      %p15 = scmp.ge.s32.totalorder %s14, 6
      %s21 = sphi 0, %s33
      %s22 = sphi 0, %s29
      %s23 = sphi 0, %s21
      %s24 = sphi 0, %s22
      %s25 = sphi 0, %s23
      %s26 = sphi 0, %s24
      %s36 = sphi 0, %s38
      %s39 = sphi 0, %s36
      %s40 = sphi 0, %s39
      %s56 = sphi 0, %s40
      %s62 = sphi 0, %s64
      %s65 = sphi 0, %s62
      %s66 = sphi 0, %s65
      %s82 = sphi 0, %s66
      %s88 = sphi 0, %s90
      %s91 = sphi 0, %s88
      %s92 = sphi 0, %s91
      %s108 = sphi 0, %s92
      %s112 = sphi 0, %s112
      %s114 = sphi 0, %s112
      %s115 = sphi 0, %s114
      %s129 = sphi 0, %s115
      %s135 = sphi 0, %s137
      %s138 = sphi 0, %s135
      %s139 = sphi 0, %s138
      %s155 = sphi 0, %s139
      %s163 = sphi 0, %s165
      %s166 = sphi 0, %s163
      %s167 = sphi 0, %s166
      %s183 = sphi 0, %s167
    $region4: #{lokr_linear_forward.1} parent=1 // loop_header_branch
      %17 = sbr.rel (%p15) target = $region8
    $region5: #{lokr_linear_forward.1} parent=1 // loop_body
      %s19 = ssub.s32 %s14, 1
      %s20 = ssub.s32 %s14, 2
      %s27 = sadd.s32 1, %s22
      %p28 = scmp.ge.s32.totalorder %s27, 2
      %s29 = scalar_select %p28, 0, %s27
      %s30 = sadd.s32 1, %s21
      %s31 = scalar_select %p28, %s30, %s21
      %p32 = scmp.ge.s32.totalorder %s31, 2
      %s33 = scalar_select %p32, 0, %s31
      %s34 = ssub.s32 %s21, %s33
      %p35 = scmp.eq.s32.totalorder %s34, 0
      %s37 = sadd.s32 %s36, 1
      %s38 = scalar_select %p35, %s36, %s37
      %p41 = pneg %p35
      %p42 = scmp.eq.s32.totalorder %s14, 3
      %p43 = por %p41, %p42
      %p44 = scmp.ne.s32.totalorder %s36, %s39
      %p45 = scmp.eq.s32.totalorder %s14, 0
      %p46 = por %p44, %p45
      %p47 = scmp.ne.s32.totalorder %s36, %s39
      %p48 = scmp.eq.s32.totalorder %s19, 3
      %p49 = por %p47, %p48
      %p50 = scmp.ne.s32.totalorder %s39, %s40
      %p51 = scmp.eq.s32.totalorder %s19, 0
      %p52 = por %p50, %p51
      %p53 = scmp.ne.s32.totalorder %s39, %s40
      %p54 = scmp.eq.s32.totalorder %s20, 3
      %p55 = por %p53, %p54
      %p57 = scmp.ne.s32.totalorder %s40, %s56
      %p58 = scmp.eq.s32.totalorder %s20, 0
      %p59 = por %p57, %p58
      %s60 = ssub.s32 %s22, %s29
      %p61 = scmp.eq.s32.totalorder %s60, 0
      %s63 = sadd.s32 %s62, 1
      %s64 = scalar_select %p61, %s62, %s63
      %p67 = pneg %p61
      %p68 = scmp.eq.s32.totalorder %s14, 3
      %p69 = por %p67, %p68
      %p70 = scmp.ne.s32.totalorder %s62, %s65
      %p71 = scmp.eq.s32.totalorder %s14, 0
      %p72 = por %p70, %p71
      %p73 = scmp.ne.s32.totalorder %s62, %s65
      %p74 = scmp.eq.s32.totalorder %s19, 3
      %p75 = por %p73, %p74
      %p76 = scmp.ne.s32.totalorder %s65, %s66
      %p77 = scmp.eq.s32.totalorder %s19, 0
      %p78 = por %p76, %p77
      %p79 = scmp.ne.s32.totalorder %s65, %s66
      %p80 = scmp.eq.s32.totalorder %s20, 3
      %p81 = por %p79, %p80
      %p83 = scmp.ne.s32.totalorder %s66, %s82
      %p84 = scmp.eq.s32.totalorder %s20, 0
      %p85 = por %p83, %p84
      %s86 = ssub.s32 %s22, %s29
      %p87 = scmp.eq.s32.totalorder %s86, 0
      %s89 = sadd.s32 %s88, 1
      %s90 = scalar_select %p87, %s88, %s89
      %p93 = pneg %p87
      %p94 = scmp.eq.s32.totalorder %s14, 3
      %p95 = por %p93, %p94
      %p96 = scmp.ne.s32.totalorder %s88, %s91
      %p97 = scmp.eq.s32.totalorder %s14, 0
      %p98 = por %p96, %p97
      %p99 = scmp.ne.s32.totalorder %s88, %s91
      %p100 = scmp.eq.s32.totalorder %s19, 3
      %p101 = por %p99, %p100
      %p102 = scmp.ne.s32.totalorder %s91, %s92
      %p103 = scmp.eq.s32.totalorder %s19, 0
      %p104 = por %p102, %p103
      %p105 = scmp.ne.s32.totalorder %s91, %s92
      %p106 = scmp.eq.s32.totalorder %s20, 3
      %p107 = por %p105, %p106
      %p109 = scmp.ne.s32.totalorder %s92, %s108
      %p110 = scmp.eq.s32.totalorder %s20, 0
      %p111 = por %p109, %p110
      %s113 = sadd.s32 %s112, 1
      %p116 = scmp.eq.s32.totalorder %s14, 3
      %p117 = scmp.ne.s32.totalorder %s112, %s114
      %p118 = scmp.eq.s32.totalorder %s14, 0
      %p119 = por %p117, %p118
      %p120 = scmp.ne.s32.totalorder %s112, %s114
      %p121 = scmp.eq.s32.totalorder %s19, 3
      %p122 = por %p120, %p121
      %p123 = scmp.ne.s32.totalorder %s114, %s115
      %p124 = scmp.eq.s32.totalorder %s19, 0
      %p125 = por %p123, %p124
      %p126 = scmp.ne.s32.totalorder %s114, %s115
      %p127 = scmp.eq.s32.totalorder %s20, 3
      %p128 = por %p126, %p127
      %p130 = scmp.ne.s32.totalorder %s115, %s129
      %p131 = scmp.eq.s32.totalorder %s20, 0
      %p132 = por %p130, %p131
      %s133 = ssub.s32 %s22, %s29
      %p134 = scmp.eq.s32.totalorder %s133, 0
      %s136 = sadd.s32 %s135, 1
      %s137 = scalar_select %p134, %s135, %s136
      %p140 = pneg %p134
      %p141 = scmp.eq.s32.totalorder %s14, 3
      %p142 = por %p140, %p141
      %p143 = scmp.ne.s32.totalorder %s135, %s138
      %p144 = scmp.eq.s32.totalorder %s14, 0
      %p145 = por %p143, %p144
      %p146 = scmp.ne.s32.totalorder %s135, %s138
      %p147 = scmp.eq.s32.totalorder %s19, 3
      %p148 = por %p146, %p147
      %p149 = scmp.ne.s32.totalorder %s138, %s139
      %p150 = scmp.eq.s32.totalorder %s19, 0
      %p151 = por %p149, %p150
      %p152 = scmp.ne.s32.totalorder %s138, %s139
      %p153 = scmp.eq.s32.totalorder %s20, 3
      %p154 = por %p152, %p153
      %p156 = scmp.ne.s32.totalorder %s139, %s155
      %p157 = scmp.eq.s32.totalorder %s20, 0
      %p158 = por %p156, %p157
      %s159 = ssub.s32 %s21, %s33
      %s160 = ssub.s32 %s22, %s29
      %s161 = sor.u32 %s159, %s160
      %p162 = scmp.eq.s32.totalorder %s161, 0
      %s164 = sadd.s32 %s163, 1
      %s165 = scalar_select %p162, %s163, %s164
      %p168 = pneg %p162
      %p169 = scmp.eq.s32.totalorder %s14, 3
      %p170 = por %p168, %p169
      %p171 = scmp.ne.s32.totalorder %s163, %s166
      %p172 = scmp.eq.s32.totalorder %s14, 0
      %p173 = por %p171, %p172
      %p174 = scmp.ne.s32.totalorder %s163, %s166
      %p175 = scmp.eq.s32.totalorder %s19, 3
      %p176 = por %p174, %p175
      %p177 = scmp.ne.s32.totalorder %s166, %s167
      %p178 = scmp.eq.s32.totalorder %s19, 0
      %p179 = por %p177, %p178
      %p180 = scmp.ne.s32.totalorder %s166, %s167
      %p181 = scmp.eq.s32.totalorder %s20, 3
      %p182 = por %p180, %p181
      %p184 = scmp.ne.s32.totalorder %s167, %s183
      %p185 = scmp.eq.s32.totalorder %s20, 0
      %p186 = por %p184, %p185
      %p187 = scmp.le.s32.totalorder 1, %s14
      %p188 = scmp.lt.s32.totalorder %s14, 5
      %p189 = pnand %p187, %p188
      %p190 = pneg %p189
      // Predicated region
      $region9: #{lokr_linear_forward.1} parent=5 // pred_check
        _
      $region10: #{lokr_linear_forward.1} parent=5 // pred_check_branch
        %192 = sbr.rel (%p189) target = $region12
      $region11: #{lokr_linear_forward.1} parent=5 // pred_region
        %s193 = ssub.s32 %s14, 1
        // Predicated region
        $region13: #{lokr_linear_forward.1} parent=11 // pred_check
          %p194 = pneg %p125
        $region14: #{lokr_linear_forward.1} parent=11 // pred_check_branch
          %196 = sbr.rel (%p194) target = $region16
        $region15: #{lokr_linear_forward.1} parent=11 // pred_region
          _
        $region16: #{lokr_linear_forward.1} parent=11 // pred_fallthru
          _
      $region12: #{lokr_linear_forward.1} parent=5 // pred_fallthru
        _
      %p197 = scmp.lt.s32.totalorder %s14, 4
      // Predicated region
      $region17: #{lokr_linear_forward.1} parent=5 // pred_check
        %p198 = pneg %p197
      $region18: #{lokr_linear_forward.1} parent=5 // pred_check_branch
        %200 = sbr.rel (%p198) target = $region20
      $region19: #{lokr_linear_forward.1} parent=5 // pred_region
        // Predicated region
        $region21: #{lokr_linear_forward.1} parent=19 // pred_check
          %p201 = pneg %p46
        $region22: #{lokr_linear_forward.1} parent=19 // pred_check_branch
          %203 = sbr.rel (%p201) target = $region24
        $region23: #{lokr_linear_forward.1} parent=19 // pred_region
          %p204 = scmp.lt.s32.totalorder %s21, 1
          %s205 = scalar_select %p204, %s21, 1
          %s206 = smul.addr %s205, 2
          %s207 = smul.addr %s206, 8
          %s208 = scalar_lea.vmem %s0, %s207
        $region24: #{lokr_linear_forward.1} parent=19 // pred_fallthru
          _
        // Predicated region
        $region25: #{lokr_linear_forward.1} parent=19 // pred_check
          %p209 = pneg %p72
        $region26: #{lokr_linear_forward.1} parent=19 // pred_check_branch
          %211 = sbr.rel (%p209) target = $region28
        $region27: #{lokr_linear_forward.1} parent=19 // pred_region
          %s212 = smul.u32 16, %s22
          %p213 = scmp.lt.s32.totalorder %s212, 31
          %s214 = scalar_select %p213, %s212, 31
          %s215 = smul.addr %s214, 2
          %s216 = smul.addr %s215, 8
          %s217 = scalar_lea.vmem %s1, %s216
          %s218 = smul.u32 16, %s22
        $region28: #{lokr_linear_forward.1} parent=19 // pred_fallthru
          _
        // Predicated region
        $region29: #{lokr_linear_forward.1} parent=19 // pred_check
          %p219 = pneg %p98
        $region30: #{lokr_linear_forward.1} parent=19 // pred_check_branch
          %221 = sbr.rel (%p219) target = $region32
        $region31: #{lokr_linear_forward.1} parent=19 // pred_region
          %p222 = scmp.lt.s32.totalorder %s22, 1
          %s223 = scalar_select %p222, %s22, 1
          %s224 = scalar_lea.vmem %s2, %s223
        $region32: #{lokr_linear_forward.1} parent=19 // pred_fallthru
          _
        // Predicated region
        $region33: #{lokr_linear_forward.1} parent=19 // pred_check
          %p225 = pneg %p145
        $region34: #{lokr_linear_forward.1} parent=19 // pred_check_branch
          %227 = sbr.rel (%p225) target = $region36
        $region35: #{lokr_linear_forward.1} parent=19 // pred_region
          %s228 = smul.u32 16, %s22
          %p229 = scmp.lt.s32.totalorder %s228, 31
          %s230 = scalar_select %p229, %s228, 31
          %s231 = smul.addr %s230, 8
          %s232 = scalar_lea.vmem %s4, %s231
          %s233 = smul.u32 16, %s22
        $region36: #{lokr_linear_forward.1} parent=19 // pred_fallthru
          _
      $region20: #{lokr_linear_forward.1} parent=5 // pred_fallthru
        _
      %p234 = scmp.le.s32.totalorder 1, %s14
      %p235 = scmp.lt.s32.totalorder %s14, 5
      %p236 = pnand %p234, %p235
      %p237 = pneg %p236
      // Predicated region
      $region37: #{lokr_linear_forward.1} parent=5 // pred_check
        _
      $region38: #{lokr_linear_forward.1} parent=5 // pred_check_branch
        %239 = sbr.rel (%p236) target = $region40
      $region39: #{lokr_linear_forward.1} parent=5 // pred_region
        %s240 = ssub.s32 %s14, 1
        %p241 = scmp.lt.s32.totalorder %s23, 1
        %s242 = scalar_select %p241, %s23, 1
        %s243 = smul.addr %s242, 2
        %s244 = smul.addr %s243, 8
        %s245 = scalar_lea.vmem %s0, %s244
        %p246 = pneg %p52
        %p247 = pneg %p49
        %s248 = smul.u32 16, %s24
        %p249 = scmp.lt.s32.totalorder %s248, 31
        %s250 = scalar_select %p249, %s248, 31
        %s251 = smul.addr %s250, 2
        %s252 = smul.addr %s251, 8
        %s253 = scalar_lea.vmem %s1, %s252
        %p254 = pneg %p78
        %p255 = pneg %p75
        %p256 = scmp.lt.s32.totalorder %s24, 1
        %s257 = scalar_select %p256, %s24, 1
        %s258 = scalar_lea.vmem %s2, %s257
        %p259 = pneg %p104
        %p260 = pneg %p101
        %p261 = pneg %p125
        %p262 = pneg %p122
        %s263 = smul.u32 16, %s24
        %p264 = scmp.lt.s32.totalorder %s263, 31
        %s265 = scalar_select %p264, %s263, 31
        %s266 = smul.addr %s265, 8
        %s267 = scalar_lea.vmem %s4, %s266
        %p268 = pneg %p151
        %p269 = pneg %p148
        %p270 = pneg %p179
        %p271 = pneg %p176
        %s272 = sand.u32 %s166, 1
        %s273 = scalar_lea.sflag [#allocation3], %s272
        %s274 = sand.u32 %s166, 1
        %s275 = smul.addr %s274, 8
        %s276 = scalar_lea.vmem [#allocation2], %s275
        %p277 = scmp.lt.s32.totalorder %s23, 1
        %s278 = scalar_select %p277, %s23, 1
        %s279 = smul.addr %s278, 2
        %s280 = smul.addr %s279, 8
        %s281 = scalar_lea.vmem %s0, %s280
        %s282 = smul.u32 16, %s24
        %p283 = scmp.lt.s32.totalorder %s282, 31
        %s284 = scalar_select %p283, %s282, 31
        %s285 = smul.addr %s284, 2
        %s286 = smul.addr %s285, 8
        %s287 = scalar_lea.vmem %s1, %s286
        %s288 = smul.u32 16, %s24
        %p289 = scmp.lt.s32.totalorder %s24, 1
        %s290 = scalar_select %p289, %s24, 1
        %s291 = scalar_lea.vmem %s2, %s290
        %s292 = smul.u32 16, %s24
        %p293 = scmp.lt.s32.totalorder %s292, 31
        %s294 = scalar_select %p293, %s292, 31
        %s295 = smul.addr %s294, 8
        %s296 = scalar_lea.vmem %s4, %s295
        %s297 = smul.u32 16, %s24
        %v298 = vld [vmem:[%s281] sm:$0xff]
        %v299 = vld [vmem:[%s281 + $0x8] sm:$0xff]
        %v300 = vld [vmem:[%s287] sm:$0xff]
        %v301 = vld [vmem:[%s287 + $0x8] sm:$0xff]
        %v302 = vld [vmem:[%s287 + $0x10] sm:$0xff]
        %v303 = vld [vmem:[%s287 + $0x18] sm:$0xff]
        %v304 = vld [vmem:[%s287 + $0x20] sm:$0xff]
        %v305 = vld [vmem:[%s287 + $0x28] sm:$0xff]
        %v306 = vld [vmem:[%s287 + $0x30] sm:$0xff]
        %v307 = vld [vmem:[%s287 + $0x38] sm:$0xff]
        %v308 = vld [vmem:[%s287 + $0x40] sm:$0xff]
        %v309 = vld [vmem:[%s287 + $0x48] sm:$0xff]
        %v310 = vld [vmem:[%s287 + $0x50] sm:$0xff]
        %v311 = vld [vmem:[%s287 + $0x58] sm:$0xff]
        %v312 = vld [vmem:[%s287 + $0x60] sm:$0xff]
        %v313 = vld [vmem:[%s287 + $0x68] sm:$0xff]
        %v314 = vld [vmem:[%s287 + $0x70] sm:$0xff]
        %v315 = vld [vmem:[%s287 + $0x78] sm:$0xff]
        %v316 = vld [vmem:[%s287 + $0x80] sm:$0xff]
        %v317 = vld [vmem:[%s287 + $0x88] sm:$0xff]
        %v318 = vld [vmem:[%s287 + $0x90] sm:$0xff]
        %v319 = vld [vmem:[%s287 + $0x98] sm:$0xff]
        %v320 = vld [vmem:[%s287 + $0xa0] sm:$0xff]
        %v321 = vld [vmem:[%s287 + $0xa8] sm:$0xff]
        %v322 = vld [vmem:[%s287 + $0xb0] sm:$0xff]
        %v323 = vld [vmem:[%s287 + $0xb8] sm:$0xff]
        %v324 = vld [vmem:[%s287 + $0xc0] sm:$0xff]
        %v325 = vld [vmem:[%s287 + $0xc8] sm:$0xff]
        %v326 = vld [vmem:[%s287 + $0xd0] sm:$0xff]
        %v327 = vld [vmem:[%s287 + $0xd8] sm:$0xff]
        %v328 = vld [vmem:[%s287 + $0xe0] sm:$0xff]
        %v329 = vld [vmem:[%s287 + $0xe8] sm:$0xff]
        %v330 = vld [vmem:[%s287 + $0xf0] sm:$0xff]
        %v331 = vld [vmem:[%s287 + $0xf8] sm:$0xff]
        %v332 = vld [vmem:[%s3] sm:$0xff]
        %v333 = vld [vmem:[%s3 + $0x8] sm:$0xff]
        %v334 = vld [vmem:[%s3 + $0x10] sm:$0xff]
        %v335 = vld [vmem:[%s3 + $0x18] sm:$0xff]
        %v336 = vld [vmem:[%s3 + $0x20] sm:$0xff]
        %v337 = vld [vmem:[%s3 + $0x28] sm:$0xff]
        %v338 = vld [vmem:[%s3 + $0x30] sm:$0xff]
        %v339 = vld [vmem:[%s3 + $0x38] sm:$0xff]
        %v340 = vld [vmem:[%s3 + $0x40] sm:$0xff]
        %v341 = vld [vmem:[%s3 + $0x48] sm:$0xff]
        %v342 = vld [vmem:[%s3 + $0x50] sm:$0xff]
        %v343 = vld [vmem:[%s3 + $0x58] sm:$0xff]
        %v344 = vld [vmem:[%s3 + $0x60] sm:$0xff]
        %v345 = vld [vmem:[%s3 + $0x68] sm:$0xff]
        %v346 = vld [vmem:[%s3 + $0x70] sm:$0xff]
        %v347 = vld [vmem:[%s3 + $0x78] sm:$0xff]
        %v348 = vld [vmem:[%s3 + $0x80] sm:$0xff]
        %v349 = vld [vmem:[%s3 + $0x88] sm:$0xff]
        %v350 = vld [vmem:[%s3 + $0x90] sm:$0xff]
        %v351 = vld [vmem:[%s3 + $0x98] sm:$0xff]
        %v352 = vld [vmem:[%s3 + $0xa0] sm:$0xff]
        %v353 = vld [vmem:[%s3 + $0xa8] sm:$0xff]
        %v354 = vld [vmem:[%s3 + $0xb0] sm:$0xff]
        %v355 = vld [vmem:[%s3 + $0xb8] sm:$0xff]
        %v356 = vld [vmem:[%s3 + $0xc0] sm:$0xff]
        %v357 = vld [vmem:[%s3 + $0xc8] sm:$0xff]
        %v358 = vld [vmem:[%s3 + $0xd0] sm:$0xff]
        %v359 = vld [vmem:[%s3 + $0xd8] sm:$0xff]
        %v360 = vld [vmem:[%s3 + $0xe0] sm:$0xff]
        %v361 = vld [vmem:[%s3 + $0xe8] sm:$0xff]
        %v362 = vld [vmem:[%s3 + $0xf0] sm:$0xff]
        %v363 = vld [vmem:[%s3 + $0xf8] sm:$0xff]
        %364 = vmatprep.subr.mxu0 0.0
        %365 = vmatpush1.msra.mxu0 %v332
        %366 = vmatprep.subr.mxu0 0.0
        %367 = vmatpush1.msra.mxu0 %v333
        %368 = vmatprep.subr.mxu0 0.0
        %369 = vmatpush1.msra.mxu0 %v334
        %370 = vmatprep.subr.mxu0 0.0
        %371 = vmatpush1.msra.mxu0 %v335
        %372 = vmatprep.subr.mxu0 0.0
        %373 = vmatpush1.msra.mxu0 %v336
        %374 = vmatprep.subr.mxu0 0.0
        %375 = vmatpush1.msra.mxu0 %v337
        %376 = vmatprep.subr.mxu0 0.0
        %377 = vmatpush1.msra.mxu0 %v338
        %378 = vmatprep.subr.mxu0 0.0
        %379 = vmatpush1.msra.mxu0 %v339
        %380 = vmatprep.subr.mxu0 0.0
        %381 = vmatpush1.msra.mxu0 %v340
        %382 = vmatprep.subr.mxu0 0.0
        %383 = vmatpush1.msra.mxu0 %v341
        %384 = vmatprep.subr.mxu0 0.0
        %385 = vmatpush1.msra.mxu0 %v342
        %386 = vmatprep.subr.mxu0 0.0
        %387 = vmatpush1.msra.mxu0 %v343
        %388 = vmatprep.subr.mxu0 0.0
        %389 = vmatpush1.msra.mxu0 %v344
        %390 = vmatprep.subr.mxu0 0.0
        %391 = vmatpush1.msra.mxu0 %v345
        %392 = vmatprep.subr.mxu0 0.0
        %393 = vmatpush1.msra.mxu0 %v346
        %394 = vmatprep.subr.mxu0 0.0
        %395 = vmatpush1.msra.mxu0 %v347
        %396 = vmatprep.subr.mxu0 0.0
        %397 = vmatpush1.msra.mxu0 %v348
        %398 = vmatprep.subr.mxu0 0.0
        %399 = vmatpush1.msra.mxu0 %v349
        %400 = vmatprep.subr.mxu0 0.0
        %401 = vmatpush1.msra.mxu0 %v350
        %402 = vmatprep.subr.mxu0 0.0
        %403 = vmatpush1.msra.mxu0 %v351
        %404 = vmatprep.subr.mxu0 0.0
        %405 = vmatpush1.msra.mxu0 %v352
        %406 = vmatprep.subr.mxu0 0.0
        %407 = vmatpush1.msra.mxu0 %v353
        %408 = vmatprep.subr.mxu0 0.0
        %409 = vmatpush1.msra.mxu0 %v354
        %410 = vmatprep.subr.mxu0 0.0
        %411 = vmatpush1.msra.mxu0 %v355
        %412 = vmatprep.subr.mxu0 0.0
        %413 = vmatpush1.msra.mxu0 %v356
        %414 = vmatprep.subr.mxu0 0.0
        %415 = vmatpush1.msra.mxu0 %v357
        %416 = vmatprep.subr.mxu0 0.0
        %417 = vmatpush1.msra.mxu0 %v358
        %418 = vmatprep.subr.mxu0 0.0
        %419 = vmatpush1.msra.mxu0 %v359
        %420 = vmatprep.subr.mxu0 0.0
        %421 = vmatpush1.msra.mxu0 %v360
        %422 = vmatprep.subr.mxu0 0.0
        %423 = vmatpush1.msra.mxu0 %v361
        %424 = vmatprep.subr.mxu0 0.0
        %425 = vmatpush1.msra.mxu0 %v362
        %426 = vmatprep.subr.mxu0 0.0
        %427 = vmatpush1.msra.mxu0 %v363
        %428 = vmatprep.mubr.f32.mxu0 %v299
        %429 = vmatmul.mubr.f32.gmra.mrb[0].mxu0 %v298
        %v430 = vpop.f32.mrb[0].mxu0
        %v431 = vadd.f32 0.0, %v430
        %v432 = vpop.f32.mrb[0].mxu0
        %433 = vdwg.mxu0
        %v434 = vld [vmem:[%s296] sm:$0xff]
        %v435 = vld [vmem:[%s296 + $0x8] sm:$0xff]
        %v436 = vld [vmem:[%s296 + $0x10] sm:$0xff]
        %v437 = vld [vmem:[%s296 + $0x18] sm:$0xff]
        %v438 = vld [vmem:[%s296 + $0x20] sm:$0xff]
        %v439 = vld [vmem:[%s296 + $0x28] sm:$0xff]
        %v440 = vld [vmem:[%s296 + $0x30] sm:$0xff]
        %v441 = vld [vmem:[%s296 + $0x38] sm:$0xff]
        %v442 = vld [vmem:[%s296 + $0x40] sm:$0xff]
        %v443 = vld [vmem:[%s296 + $0x48] sm:$0xff]
        %v444 = vld [vmem:[%s296 + $0x50] sm:$0xff]
        %v445 = vld [vmem:[%s296 + $0x58] sm:$0xff]
        %v446 = vld [vmem:[%s296 + $0x60] sm:$0xff]
        %v447 = vld [vmem:[%s296 + $0x68] sm:$0xff]
        %v448 = vld [vmem:[%s296 + $0x70] sm:$0xff]
        %v449 = vld [vmem:[%s296 + $0x78] sm:$0xff]
        %vm450 = vcmask 523264
        %v452 = vsel %vm450, %v431, 0
        %v455 = vsel %vm450, %v434, 0
        %v458 = vsel %vm450, %v435, 0
        %v461 = vsel %vm450, %v436, 0
        %v464 = vsel %vm450, %v437, 0
        %v467 = vsel %vm450, %v438, 0
        %v470 = vsel %vm450, %v439, 0
        %v473 = vsel %vm450, %v440, 0
        %v476 = vsel %vm450, %v441, 0
        %v479 = vsel %vm450, %v442, 0
        %v482 = vsel %vm450, %v443, 0
        %v485 = vsel %vm450, %v444, 0
        %v488 = vsel %vm450, %v445, 0
        %v491 = vsel %vm450, %v446, 0
        %v494 = vsel %vm450, %v447, 0
        %v497 = vsel %vm450, %v448, 0
        %v500 = vsel %vm450, %v449, 0
        %502 = vmatprep.subr.mxu0 0.0
        %503 = vmatpush1.xpose.msra.mxu0 %v455
        %504 = vmatprep.subr.mxu0 0.0
        %505 = vmatpush1.xpose.msra.mxu0 %v458
        %506 = vmatprep.subr.mxu0 0.0
        %507 = vmatpush1.xpose.msra.mxu0 %v461
        %508 = vmatprep.subr.mxu0 0.0
        %509 = vmatpush1.xpose.msra.mxu0 %v464
        %510 = vmatprep.subr.mxu0 0.0
        %511 = vmatpush1.xpose.msra.mxu0 %v467
        %512 = vmatprep.subr.mxu0 0.0
        %513 = vmatpush1.xpose.msra.mxu0 %v470
        %514 = vmatprep.subr.mxu0 0.0
        %515 = vmatpush1.xpose.msra.mxu0 %v473
        %516 = vmatprep.subr.mxu0 0.0
        %517 = vmatpush1.xpose.msra.mxu0 %v476
        %518 = vmatprep.subr.mxu0 0.0
        %519 = vmatpush1.xpose.msra.mxu0 %v479
        %520 = vmatprep.subr.mxu0 0.0
        %521 = vmatpush1.xpose.msra.mxu0 %v482
        %522 = vmatprep.subr.mxu0 0.0
        %523 = vmatpush1.xpose.msra.mxu0 %v485
        %524 = vmatprep.subr.mxu0 0.0
        %525 = vmatpush1.xpose.msra.mxu0 %v488
        %526 = vmatprep.subr.mxu0 0.0
        %527 = vmatpush1.xpose.msra.mxu0 %v491
        %528 = vmatprep.subr.mxu0 0.0
        %529 = vmatpush1.xpose.msra.mxu0 %v494
        %530 = vmatprep.subr.mxu0 0.0
        %531 = vmatpush1.xpose.msra.mxu0 %v497
        %532 = vmatprep.subr.mxu0 0.0
        %533 = vmatpush1.xpose.msra.mxu0 %v500
        %534 = vmatprep.subr.mxu0 0.0
        %535 = vmatpush1.xpose.msra.mxu0 0.0
        %536 = vmatprep.subr.mxu0 0.0
        %537 = vmatpush1.xpose.msra.mxu0 0.0
        %538 = vmatprep.subr.mxu0 0.0
        %539 = vmatpush1.xpose.msra.mxu0 0.0
        %540 = vmatprep.subr.mxu0 0.0
        %541 = vmatpush1.xpose.msra.mxu0 0.0
        %542 = vmatprep.subr.mxu0 0.0
        %543 = vmatpush1.xpose.msra.mxu0 0.0
        %544 = vmatprep.subr.mxu0 0.0
        %545 = vmatpush1.xpose.msra.mxu0 0.0
        %546 = vmatprep.subr.mxu0 0.0
        %547 = vmatpush1.xpose.msra.mxu0 0.0
        %548 = vmatprep.subr.mxu0 0.0
        %549 = vmatpush1.xpose.msra.mxu0 0.0
        %550 = vmatprep.subr.mxu0 0.0
        %551 = vmatpush1.xpose.msra.mxu0 0.0
        %552 = vmatprep.subr.mxu0 0.0
        %553 = vmatpush1.xpose.msra.mxu0 0.0
        %554 = vmatprep.subr.mxu0 0.0
        %555 = vmatpush1.xpose.msra.mxu0 0.0
        %556 = vmatprep.subr.mxu0 0.0
        %557 = vmatpush1.xpose.msra.mxu0 0.0
        %558 = vmatprep.subr.mxu0 0.0
        %559 = vmatpush1.xpose.msra.mxu0 0.0
        %560 = vmatprep.subr.mxu0 0.0
        %561 = vmatpush1.xpose.msra.mxu0 0.0
        %562 = vmatprep.subr.mxu0 0.0
        %563 = vmatpush1.xpose.msra.mxu0 0.0
        %564 = vmatprep.subr.mxu0 0.0
        %565 = vmatpush1.xpose.msra.mxu0 0.0
        %566 = vmatprep.mubr.f32.mxu0 0.0
        %567 = vmatmul.mubr.f32.gmra.mrb[0].mxu0 %v452
        %v568 = vpop.f32.mrb[0].mxu0
        %v569 = vadd.f32 0.0, %v568
        %v570 = vpop.f32.mrb[0].mxu0
        %571 = vdwg.mxu0
        %572 = vmatprep.subr.mxu0 %v301
        %573 = vmatpush1.xpose.msra.mxu0 %v300
        %574 = vmatprep.subr.mxu0 %v303
        %575 = vmatpush1.xpose.msra.mxu0 %v302
        %576 = vmatprep.subr.mxu0 %v305
        %577 = vmatpush1.xpose.msra.mxu0 %v304
        %578 = vmatprep.subr.mxu0 %v307
        %579 = vmatpush1.xpose.msra.mxu0 %v306
        %580 = vmatprep.subr.mxu0 %v309
        %581 = vmatpush1.xpose.msra.mxu0 %v308
        %582 = vmatprep.subr.mxu0 %v311
        %583 = vmatpush1.xpose.msra.mxu0 %v310
        %584 = vmatprep.subr.mxu0 %v313
        %585 = vmatpush1.xpose.msra.mxu0 %v312
        %586 = vmatprep.subr.mxu0 %v315
        %587 = vmatpush1.xpose.msra.mxu0 %v314
        %588 = vmatprep.subr.mxu0 %v317
        %589 = vmatpush1.xpose.msra.mxu0 %v316
        %590 = vmatprep.subr.mxu0 %v319
        %591 = vmatpush1.xpose.msra.mxu0 %v318
        %592 = vmatprep.subr.mxu0 %v321
        %593 = vmatpush1.xpose.msra.mxu0 %v320
        %594 = vmatprep.subr.mxu0 %v323
        %595 = vmatpush1.xpose.msra.mxu0 %v322
        %596 = vmatprep.subr.mxu0 %v325
        %597 = vmatpush1.xpose.msra.mxu0 %v324
        %598 = vmatprep.subr.mxu0 %v327
        %599 = vmatpush1.xpose.msra.mxu0 %v326
        %600 = vmatprep.subr.mxu0 %v329
        %601 = vmatpush1.xpose.msra.mxu0 %v328
        %602 = vmatprep.subr.mxu0 %v331
        %603 = vmatpush1.xpose.msra.mxu0 %v330
        %604 = vmatprep.subr.mxu0 0.0
        %605 = vmatpush1.xpose.msra.mxu0 0.0
        %606 = vmatprep.subr.mxu0 0.0
        %607 = vmatpush1.xpose.msra.mxu0 0.0
        %608 = vmatprep.subr.mxu0 0.0
        %609 = vmatpush1.xpose.msra.mxu0 0.0
        %610 = vmatprep.subr.mxu0 0.0
        %611 = vmatpush1.xpose.msra.mxu0 0.0
        %612 = vmatprep.subr.mxu0 0.0
        %613 = vmatpush1.xpose.msra.mxu0 0.0
        %614 = vmatprep.subr.mxu0 0.0
        %615 = vmatpush1.xpose.msra.mxu0 0.0
        %616 = vmatprep.subr.mxu0 0.0
        %617 = vmatpush1.xpose.msra.mxu0 0.0
        %618 = vmatprep.subr.mxu0 0.0
        %619 = vmatpush1.xpose.msra.mxu0 0.0
        %620 = vmatprep.subr.mxu0 0.0
        %621 = vmatpush1.xpose.msra.mxu0 0.0
        %622 = vmatprep.subr.mxu0 0.0
        %623 = vmatpush1.xpose.msra.mxu0 0.0
        %624 = vmatprep.subr.mxu0 0.0
        %625 = vmatpush1.xpose.msra.mxu0 0.0
        %626 = vmatprep.subr.mxu0 0.0
        %627 = vmatpush1.xpose.msra.mxu0 0.0
        %628 = vmatprep.subr.mxu0 0.0
        %629 = vmatpush1.xpose.msra.mxu0 0.0
        %630 = vmatprep.subr.mxu0 0.0
        %631 = vmatpush1.xpose.msra.mxu0 0.0
        %632 = vmatprep.subr.mxu0 0.0
        %633 = vmatpush1.xpose.msra.mxu0 0.0
        %634 = vmatprep.subr.mxu0 0.0
        %635 = vmatpush1.xpose.msra.mxu0 0.0
        %636 = vmatprep.mubr.f32.mxu0 %v299
        %637 = vmatmul.mubr.f32.gmra.mrb[0].mxu0 %v298
        %v638 = vpop.f32.mrb[0].mxu0
        %v639 = vadd.f32 %v569, %v638
        %v640 = vpop.f32.mrb[0].mxu0
        %641 = vdwg.mxu0
        %v642 = vld [vmem:[%s291] sm:$0x1]
        %v644 = vlaneseq
        %v645 = vshrl.u32 %v644, 7
        %v646 = vsub.s32 0, %v645
        %v647 = vrot.slane %v642, %v646
        %v649 = vadd.f32 %v639, %v647
        %650 = vst [vmem:[%s276] sm:$0xff] %v649
        %s651 = sand.u32 %s166, 1
        %s652 = scalar_lea.sflag [#allocation3], %s651
        %s653 = sand.u32 %s166, 1
        %s654 = smul.addr %s653, 8
        %s655 = scalar_lea.vmem [#allocation2], %s654
        // Predicated region
        $region41: #{lokr_linear_forward.1} parent=39 // pred_check
          %p656 = pneg %p176
        $region42: #{lokr_linear_forward.1} parent=39 // pred_check_branch
          %658 = sbr.rel (%p656) target = $region44
        $region43: #{lokr_linear_forward.1} parent=39 // pred_region
          %s660 = ssub.s32 128, 128
          %661 = vsyncadd %s652, %s660
          %s662 = smul.addr %s23, 2
          %s663 = sadd.s32 %s24, %s662
          %s664 = smul.addr %s663, 128
          %s665 = scalar_lea.hbm %s5, %s664
          %s667 = sshll.u32 %s655, 4
          %s668 = int_to_ptr.vmem [resolvable:$true] %s667
          %670 = dma.vmem_to_hbm [thread:$0]  %s668, 128, %s665, %s652
        $region44: #{lokr_linear_forward.1} parent=39 // pred_fallthru
          _
      $region40: #{lokr_linear_forward.1} parent=5 // pred_fallthru
        _
      %p671 = scmp.le.s32.totalorder 2, %s14
      // Predicated region
      $region45: #{lokr_linear_forward.1} parent=5 // pred_check
        %p672 = pneg %p671
      $region46: #{lokr_linear_forward.1} parent=5 // pred_check_branch
        %674 = sbr.rel (%p672) target = $region48
      $region47: #{lokr_linear_forward.1} parent=5 // pred_region
        %s675 = ssub.s32 %s14, 2
        // Predicated region
        $region49: #{lokr_linear_forward.1} parent=47 // pred_check
          %p676 = pneg %p182
        $region50: #{lokr_linear_forward.1} parent=47 // pred_check_branch
          %678 = sbr.rel (%p676) target = $region52
        $region51: #{lokr_linear_forward.1} parent=47 // pred_region
          %s679 = sand.u32 %s167, 1
          %s680 = scalar_lea.sflag [#allocation3], %s679
          %s681 = sand.u32 %s167, 1
          %s682 = smul.addr %s681, 8
          %s683 = scalar_lea.vmem [#allocation2], %s682
          %684 = dma.done %s680, 128
        $region52: #{lokr_linear_forward.1} parent=47 // pred_fallthru
          _
      $region48: #{lokr_linear_forward.1} parent=5 // pred_fallthru
        _
    $region6: #{lokr_linear_forward.1} parent=1 // loop_footer
      %s18 = sadd.s32 1, %s14
    $region7: #{lokr_linear_forward.1} parent=1 // loop_footer_branch
      %13 = sbr.rel target = $region3
    $region8: #{lokr_linear_forward.1} parent=1 // loop_exit
      _
    %685 = vsyncpa [#allocation3], 1
    %s686 = scalar_lea.sflag [#allocation3], 1
    %687 = vsyncpa %s686, 1

</llo_original>
